<compile_context>
chip_gen: v6e
topology: v6e:2x2x1
jax: 0.10.0
libtpu: 0.0.40
codegen_flags: <defaults>
</compile_context>

<pallas_src>
import functools

import jax
import jax.numpy as jnp
from jax import lax
from jax.experimental import pallas as pl
from jax.experimental.pallas import tpu as pltpu


def _resblock_kernel(x_ref, w1_ref, b1_ref, w2_ref, b2_ref, o_ref, *, rpi, h_img):
    """One batch chunk in the row-dense padded layout.

    x_ref : (M, L)       f32   M = NB*rpi rows; each row = one padded image row,
                               L = (W+2)*C lanes (channel fastest).
    w1_ref: (3, L, Lh)   bf16  per-dy block-Toeplitz conv1 weights (dx in lanes)
    b1_ref: (1, Lh)      f32   bias tiled over j in [1, W], zero on pad columns
    w2_ref: (3, Lh, L)   bf16  conv2 weights, same structure
    b2_ref: (1, L)       f32
    o_ref : (M, L)       bf16  output, same layout (interior rows/cols valid)
    """
    M = x_ref.shape[0]
    x32 = x_ref[...]                                     # (M, L) f32

    # Interior-row mask (padded row index i in [1, H]); computed in-kernel so
    # there is no HBM mask stream.  Chunks start at multiples of rpi, so the
    # local row index mod rpi is exactly the within-image padded row index.
    rid = lax.broadcasted_iota(jnp.int32, (M, 1), 0) % rpi
    row_mask = ((rid >= 1) & (rid <= h_img)).astype(jnp.float32)

    def conv3x3(act32, w_ref):
        # dy taps via sublane rolls of the activation (pre-aligned, so all
        # three matmul results accumulate into one accumulator); dx taps are
        # folded into the banded weights, so this is 3 MXU matmuls with
        # K = L instead of 9 with K = C plus per-tap f32 realignment rolls.
        # TODO(synk): roll the bf16 copy instead of f32 once packed sublane
        # rotate is guaranteed on every target generation (halves XLU bytes).
        up = pltpu.roll(act32, shift=1, axis=0)          # row r-1  (dy = 0)
        dn = pltpu.roll(act32, shift=M - 1, axis=0)      # row r+1  (dy = 2)
        acc = jnp.dot(up.astype(jnp.bfloat16), w_ref[0],
                      preferred_element_type=jnp.float32)
        acc = acc + jnp.dot(act32.astype(jnp.bfloat16), w_ref[1],
                            preferred_element_type=jnp.float32)
        acc = acc + jnp.dot(dn.astype(jnp.bfloat16), w_ref[2],
                            preferred_element_type=jnp.float32)
        return acc

    # ---- conv1 + bias + ReLU.  row_mask re-establishes the top/bottom zero
    # padding of the hidden activation; left/right padding is already zero by
    # construction of the banded weights and the zeroed bias lanes.
    h = jnp.maximum(conv3x3(x32, w1_ref) + b1_ref[...], 0.0) * row_mask

    # ---- conv2 + bias + exact f32 residual + ReLU, stored as bf16.
    out = conv3x3(h, w2_ref) + b2_ref[...] + x32
    o_ref[...] = jnp.maximum(out, 0.0).astype(o_ref.dtype)


def _banded_weights(w_hwio, width):
    """(3,3,Cin,Cout) HWIO -> (3, (W+2)*Cin, (W+2)*Cout) bf16 block-Toeplitz.

    band[dy][(j+dx-1)*Cin + ci, j*Cout + co] = w[dy, dx, ci, co] for j in [1,W];
    output lane blocks j = 0 and j = W+1 stay identically zero, so the conv
    result comes out with its left/right zero padding already in place.
    """
    wp = width + 2
    cin, cout = w_hwio.shape[2], w_hwio.shape[3]
    jin = jnp.arange(wp)[:, None]
    jout = jnp.arange(wp)[None, :]
    dx = jin - jout + 1
    valid = (dx >= 0) & (dx <= 2) & (jout >= 1) & (jout <= width)
    blocks = w_hwio.astype(jnp.float32)[:, jnp.clip(dx, 0, 2)]   # (3, wp, wp, cin, cout)
    blocks = jnp.where(valid[None, :, :, None, None], blocks, 0.0)
    return (blocks.transpose(0, 1, 3, 2, 4)
            .reshape(3, wp * cin, wp * cout).astype(jnp.bfloat16))


@jax.jit
def resblock_pallas(x_nchw, w1, b1, w2, b2):
    """x: (N, C, H, W); w1: (3,3,C,Ch) HWIO; b1: (Ch,); w2: (3,3,Ch,C); b2: (C,)."""
    N, C, H, W = x_nchw.shape
    Ch = w1.shape[3]
    Wp = W + 2
    L = Wp * C                      # input  lane width (72 for the test shape)
    Lh = Wp * Ch                    # hidden lane width
    RPI = ((H + 2 + 7) // 8) * 8    # per-image row pitch (sublane aligned)

    # ---- VMEM-budget-driven batch chunking (grid >= 2 when possible: v7x) ----
    try:
        vmem_cap = int(getattr(pltpu.get_tpu_info(), "vmem_capacity_bytes", 0)) or (64 << 20)
    except Exception:
        vmem_cap = 64 << 20         # v7x-safe lower bound
    row_bytes = (L * 4 * 2          # f32 input block, double-buffered
                 + L * 2 * 2        # bf16 output block, double-buffered
                 + (L + Lh) * 4 * 4)  # in-kernel f32 temporaries (rolls, acc, h)
    per_img = RPI * row_bytes
    budget = max(1 << 20, int(vmem_cap * 0.4))
    NB = max(1, min(N, budget // max(per_img, 1)))
    if N >= 2:
        NB = min(NB, (N + 1) // 2)  # keep at least 2 grid steps (v7x: 2 TCs)
    G = -(-N // NB)                 # ceil
    Npad = G * NB                   # pad batch instead of shrinking NB to 1

    # ---- layout: NCHW -> row-dense zero-padded rows (Npad*RPI, (W+2)*C) f32 ----
    x_nhwc = jnp.transpose(x_nchw, (0, 2, 3, 1)).astype(jnp.float32)
    x_rows = jnp.pad(x_nhwc, ((0, Npad - N), (1, RPI - H - 1), (1, 1), (0, 0)))
    x_rows = x_rows.reshape(Npad * RPI, L)

    # ---- banded weights + bias lane vectors (pad columns zeroed) ----
    w1_band = _banded_weights(w1, W)            # (3, L,  Lh) bf16
    w2_band = _banded_weights(w2, W)            # (3, Lh, L ) bf16
    jmask = ((jnp.arange(Wp) >= 1) & (jnp.arange(Wp) <= W)).astype(jnp.float32)
    b1_lane = (jmask[:, None] * b1.astype(jnp.float32)[None, :]).reshape(1, Lh)
    b2_lane = (jmask[:, None] * b2.astype(jnp.float32)[None, :]).reshape(1, L)

    M_blk = NB * RPI
    kernel = functools.partial(_resblock_kernel, rpi=RPI, h_img=H)
    vmem_limit = max(32 << 20, int(vmem_cap * 0.8))

    out_rows = pl.pallas_call(
        kernel,
        out_shape=jax.ShapeDtypeStruct((Npad * RPI, L), jnp.bfloat16),
        grid_spec=pltpu.PrefetchScalarGridSpec(
            num_scalar_prefetch=0,
            grid=(G,),
            in_specs=[
                pl.BlockSpec((M_blk, L), lambda g: (g, 0)),       # x rows (f32)
                pl.BlockSpec((3, L, Lh), lambda g: (0, 0, 0)),    # conv1 banded W
                pl.BlockSpec((1, Lh), lambda g: (0, 0)),          # conv1 bias lanes
                pl.BlockSpec((3, Lh, L), lambda g: (0, 0, 0)),    # conv2 banded W
                pl.BlockSpec((1, L), lambda g: (0, 0)),           # conv2 bias lanes
            ],
            out_specs=pl.BlockSpec((M_blk, L), lambda g: (g, 0)),
        ),
        compiler_params=pltpu.CompilerParams(
            dimension_semantics=("parallel",),
            vmem_limit_bytes=vmem_limit),
    )(x_rows, w1_band, b1_lane, w2_band, b2_lane)

    # ---- un-pad: rows i in [1,H], lane blocks j in [1,W]; back to f32 NCHW ----
    out = out_rows.reshape(Npad, RPI, Wp, C)[:N, 1:H + 1, 1:W + 1, :]
    return jnp.transpose(out, (0, 3, 1, 2)).astype(x_nchw.dtype)


def resblock_reference(x_nchw, w1, b1, w2, b2):
    """Pure-JAX reference (NCHW, matches PyTorch Conv2d semantics)."""
    k1 = jnp.transpose(w1, (3, 2, 0, 1))  # HWIO -> OIHW
    k2 = jnp.transpose(w2, (3, 2, 0, 1))
    dn = ("NCHW", "OIHW", "NCHW")
    h = lax.conv_general_dilated(x_nchw, k1, (1, 1), [(1, 1), (1, 1)],
                                 dimension_numbers=dn)
    h = jnp.maximum(h + b1[None, :, None, None], 0.0)
    o = lax.conv_general_dilated(h, k2, (1, 1), [(1, 1), (1, 1)],
                                 dimension_numbers=dn)
    o = o + b2[None, :, None, None] + x_nchw
    return jnp.maximum(o, 0.0)


if __name__ == "__main__":
    N, C, H, W = 2, 4, 16, 16
    Ch = C  # dim_hidden defaults to dim

    key = jax.random.PRNGKey(0)
    kx, kw1, kb1, kw2, kb2 = jax.random.split(key, 5)
    x = jax.random.normal(kx, (N, C, H, W), jnp.float32)
    w1 = jax.random.normal(kw1, (3, 3, C, Ch), jnp.float32) * 0.1   # HWIO
    b1 = jax.random.normal(kb1, (Ch,), jnp.float32) * 0.01
    w2 = jax.random.normal(kw2, (3, 3, Ch, C), jnp.float32) * 0.1   # HWIO
    b2 = jax.random.normal(kb2, (C,), jnp.float32) * 0.01

    out = jax.block_until_ready(resblock_pallas(x, w1, b1, w2, b2))
    ref = resblock_reference(x, w1, b1, w2, b2)

    assert out.shape == (N, C, H, W)
    # bf16 MXU inputs and bf16 output stream (residual is exact f32) =>
    # ~1e-2-level error vs the f32 reference.
    if not jnp.allclose(out, ref, atol=3e-2, rtol=3e-2):
        err = float(jnp.max(jnp.abs(out - ref)))
        raise AssertionError(f"Pallas ResBlock mismatch vs reference (max abs err {err})")

    print("KERNEL_OK")
</pallas_src>

<mosaic_0001>
module attributes {stable_mosaic.version = 11 : i64} {
  func.func @_resblock_kernel(%arg0: i32, %arg1: memref<24x72xf32, #tpu.memory_space<vmem>>, %arg2: memref<3x72x72xbf16, #tpu.memory_space<vmem>>, %arg3: memref<1x72xf32, #tpu.memory_space<vmem>>, %arg4: memref<3x72x72xbf16, #tpu.memory_space<vmem>>, %arg5: memref<1x72xf32, #tpu.memory_space<vmem>>, %arg6: memref<24x72xbf16, #tpu.memory_space<vmem>>) attributes {dimension_semantics = [#tpu.dimension_semantics<parallel>], iteration_bounds = array<i64: 2>, scalar_prefetch = 0 : i64, scratch_operands = 0 : i64, tpu.core_type = #tpu.core_type<tc>, window_params = [{transform_indices = @transform_0, window_bounds = array<i64: 24, 72>}, {pipeline_mode = #tpu.pipeline_mode<synchronous>, transform_indices = @transform_1, window_bounds = array<i64: 3, 72, 72>}, {pipeline_mode = #tpu.pipeline_mode<synchronous>, transform_indices = @transform_2, window_bounds = array<i64: 1, 72>}, {pipeline_mode = #tpu.pipeline_mode<synchronous>, transform_indices = @transform_3, window_bounds = array<i64: 3, 72, 72>}, {pipeline_mode = #tpu.pipeline_mode<synchronous>, transform_indices = @transform_4, window_bounds = array<i64: 1, 72>}, {transform_indices = @transform_5, window_bounds = array<i64: 24, 72>}]} {
    %c0 = arith.constant 0 : index
    %c0_0 = arith.constant 0 : index
    %0 = vector.load %arg1[%c0, %c0_0] : memref<24x72xf32, #tpu.memory_space<vmem>>, vector<24x72xf32>
    %1 = tpu.iota {dimensions = array<i32: 0>} : vector<24x1xi32>
    %c24_i32 = arith.constant 24 : i32
    %c0_i32 = arith.constant 0 : i32
    %2 = arith.cmpi eq, %c24_i32, %c0_i32 : i32
    %c1_i32 = arith.constant 1 : i32
    %3 = arith.select %2, %c1_i32, %c24_i32 : i32
    %4 = vector.broadcast %3 : i32 to vector<24x1xi32>
    %5 = arith.remsi %1, %4 : vector<24x1xi32>
    %c0_i32_1 = arith.constant 0 : i32
    %6 = vector.broadcast %c0_i32_1 : i32 to vector<24x1xi32>
    %7 = arith.cmpi ne, %5, %6 : vector<24x1xi32>
    %c0_i32_2 = arith.constant 0 : i32
    %8 = vector.broadcast %c0_i32_2 : i32 to vector<24x1xi32>
    %9 = arith.cmpi slt, %5, %8 : vector<24x1xi32>
    %c0_i32_3 = arith.constant 0 : i32
    %10 = arith.cmpi slt, %3, %c0_i32_3 : i32
    %11 = vector.broadcast %10 : i1 to vector<24x1xi1>
    %12 = vector.broadcast %11 : vector<24x1xi1> to vector<24x1xi1>
    %13 = arith.xori %9, %12 : vector<24x1xi1>
    %14 = arith.andi %13, %7 : vector<24x1xi1>
    %15 = vector.broadcast %3 : i32 to vector<24x1xi32>
    %16 = arith.addi %5, %15 : vector<24x1xi32>
    %17 = arith.select %14, %16, %5 : vector<24x1xi1>, vector<24x1xi32>
    %c1_i32_4 = arith.constant 1 : i32
    %18 = vector.broadcast %c1_i32_4 : i32 to vector<24x1xi32>
    %19 = arith.cmpi sge, %17, %18 : vector<24x1xi32>
    %c16_i32 = arith.constant 16 : i32
    %20 = vector.broadcast %c16_i32 : i32 to vector<24x1xi32>
    %21 = arith.cmpi sle, %17, %20 : vector<24x1xi32>
    %22 = arith.andi %19, %21 : vector<24x1xi1>
    %23 = arith.extui %22 : vector<24x1xi1> to vector<24x1xi32>
    %24 = arith.sitofp %23 : vector<24x1xi32> to vector<24x1xf32>
    %c1_i32_5 = arith.constant 1 : i32
    %25 = tpu.dynamic_rotate %0 by %c1_i32_5 dim 0 : vector<24x72xf32>, i32 -> vector<24x72xf32>
    %c23_i32 = arith.constant 23 : i32
    %26 = tpu.dynamic_rotate %0 by %c23_i32 dim 0 : vector<24x72xf32>, i32 -> vector<24x72xf32>
    %27 = arith.truncf %25 : vector<24x72xf32> to vector<24x72xbf16>
    %c0_6 = arith.constant 0 : index
    %c0_7 = arith.constant 0 : index
    %c0_8 = arith.constant 0 : index
    %28 = vector.load %arg2[%c0_6, %c0_7, %c0_8] : memref<3x72x72xbf16, #tpu.memory_space<vmem>>, vector<1x72x72xbf16>
    %29 = vector.shape_cast %28 : vector<1x72x72xbf16> to vector<72x72xbf16>
    %cst = arith.constant dense<0.000000e+00> : vector<24x72xf32>
    %30 = tpu.matmul %27, %29, %cst {dimension_numbers = #tpu.dot_dimension_numbers<[1], [0], [0], [1], [0, 0, 1, 1], [], []>} : vector<24x72xbf16>, vector<72x72xbf16>, vector<24x72xf32> -> vector<24x72xf32>
    %31 = arith.truncf %0 : vector<24x72xf32> to vector<24x72xbf16>
    %c1 = arith.constant 1 : index
    %c0_9 = arith.constant 0 : index
    %c0_10 = arith.constant 0 : index
    %32 = vector.load %arg2[%c1, %c0_9, %c0_10] : memref<3x72x72xbf16, #tpu.memory_space<vmem>>, vector<1x72x72xbf16>
    %33 = vector.shape_cast %32 : vector<1x72x72xbf16> to vector<72x72xbf16>
    %cst_11 = arith.constant dense<0.000000e+00> : vector<24x72xf32>
    %34 = tpu.matmul %31, %33, %cst_11 {dimension_numbers = #tpu.dot_dimension_numbers<[1], [0], [0], [1], [0, 0, 1, 1], [], []>} : vector<24x72xbf16>, vector<72x72xbf16>, vector<24x72xf32> -> vector<24x72xf32>
    %35 = arith.addf %30, %34 : vector<24x72xf32>
    %36 = arith.truncf %26 : vector<24x72xf32> to vector<24x72xbf16>
    %c2 = arith.constant 2 : index
    %c0_12 = arith.constant 0 : index
    %c0_13 = arith.constant 0 : index
    %37 = vector.load %arg2[%c2, %c0_12, %c0_13] : memref<3x72x72xbf16, #tpu.memory_space<vmem>>, vector<1x72x72xbf16>
    %38 = vector.shape_cast %37 : vector<1x72x72xbf16> to vector<72x72xbf16>
    %cst_14 = arith.constant dense<0.000000e+00> : vector<24x72xf32>
    %39 = tpu.matmul %36, %38, %cst_14 {dimension_numbers = #tpu.dot_dimension_numbers<[1], [0], [0], [1], [0, 0, 1, 1], [], []>} : vector<24x72xbf16>, vector<72x72xbf16>, vector<24x72xf32> -> vector<24x72xf32>
    %40 = arith.addf %35, %39 : vector<24x72xf32>
    %c0_15 = arith.constant 0 : index
    %c0_16 = arith.constant 0 : index
    %41 = vector.load %arg3[%c0_15, %c0_16] : memref<1x72xf32, #tpu.memory_space<vmem>>, vector<1x72xf32>
    %42 = vector.broadcast %41 : vector<1x72xf32> to vector<24x72xf32>
    %43 = arith.addf %40, %42 : vector<24x72xf32>
    %cst_17 = arith.constant 0.000000e+00 : f32
    %44 = vector.broadcast %cst_17 : f32 to vector<24x72xf32>
    %45 = arith.maximumf %43, %44 : vector<24x72xf32>
    %46 = vector.broadcast %24 : vector<24x1xf32> to vector<24x72xf32>
    %47 = arith.mulf %45, %46 : vector<24x72xf32>
    %c1_i32_18 = arith.constant 1 : i32
    %48 = tpu.dynamic_rotate %47 by %c1_i32_18 dim 0 : vector<24x72xf32>, i32 -> vector<24x72xf32>
    %c23_i32_19 = arith.constant 23 : i32
    %49 = tpu.dynamic_rotate %47 by %c23_i32_19 dim 0 : vector<24x72xf32>, i32 -> vector<24x72xf32>
    %50 = arith.truncf %48 : vector<24x72xf32> to vector<24x72xbf16>
    %c0_20 = arith.constant 0 : index
    %c0_21 = arith.constant 0 : index
    %c0_22 = arith.constant 0 : index
    %51 = vector.load %arg4[%c0_20, %c0_21, %c0_22] : memref<3x72x72xbf16, #tpu.memory_space<vmem>>, vector<1x72x72xbf16>
    %52 = vector.shape_cast %51 : vector<1x72x72xbf16> to vector<72x72xbf16>
    %cst_23 = arith.constant dense<0.000000e+00> : vector<24x72xf32>
    %53 = tpu.matmul %50, %52, %cst_23 {dimension_numbers = #tpu.dot_dimension_numbers<[1], [0], [0], [1], [0, 0, 1, 1], [], []>} : vector<24x72xbf16>, vector<72x72xbf16>, vector<24x72xf32> -> vector<24x72xf32>
    %54 = arith.truncf %47 : vector<24x72xf32> to vector<24x72xbf16>
    %c1_24 = arith.constant 1 : index
    %c0_25 = arith.constant 0 : index
    %c0_26 = arith.constant 0 : index
    %55 = vector.load %arg4[%c1_24, %c0_25, %c0_26] : memref<3x72x72xbf16, #tpu.memory_space<vmem>>, vector<1x72x72xbf16>
    %56 = vector.shape_cast %55 : vector<1x72x72xbf16> to vector<72x72xbf16>
    %cst_27 = arith.constant dense<0.000000e+00> : vector<24x72xf32>
    %57 = tpu.matmul %54, %56, %cst_27 {dimension_numbers = #tpu.dot_dimension_numbers<[1], [0], [0], [1], [0, 0, 1, 1], [], []>} : vector<24x72xbf16>, vector<72x72xbf16>, vector<24x72xf32> -> vector<24x72xf32>
    %58 = arith.addf %53, %57 : vector<24x72xf32>
    %59 = arith.truncf %49 : vector<24x72xf32> to vector<24x72xbf16>
    %c2_28 = arith.constant 2 : index
    %c0_29 = arith.constant 0 : index
    %c0_30 = arith.constant 0 : index
    %60 = vector.load %arg4[%c2_28, %c0_29, %c0_30] : memref<3x72x72xbf16, #tpu.memory_space<vmem>>, vector<1x72x72xbf16>
    %61 = vector.shape_cast %60 : vector<1x72x72xbf16> to vector<72x72xbf16>
    %cst_31 = arith.constant dense<0.000000e+00> : vector<24x72xf32>
    %62 = tpu.matmul %59, %61, %cst_31 {dimension_numbers = #tpu.dot_dimension_numbers<[1], [0], [0], [1], [0, 0, 1, 1], [], []>} : vector<24x72xbf16>, vector<72x72xbf16>, vector<24x72xf32> -> vector<24x72xf32>
    %63 = arith.addf %58, %62 : vector<24x72xf32>
    %c0_32 = arith.constant 0 : index
    %c0_33 = arith.constant 0 : index
    %64 = vector.load %arg5[%c0_32, %c0_33] : memref<1x72xf32, #tpu.memory_space<vmem>>, vector<1x72xf32>
    %65 = vector.broadcast %64 : vector<1x72xf32> to vector<24x72xf32>
    %66 = arith.addf %63, %65 : vector<24x72xf32>
    %67 = arith.addf %66, %0 : vector<24x72xf32>
    %cst_34 = arith.constant 0.000000e+00 : f32
    %68 = vector.broadcast %cst_34 : f32 to vector<24x72xf32>
    %69 = arith.maximumf %67, %68 : vector<24x72xf32>
    %70 = arith.truncf %69 : vector<24x72xf32> to vector<24x72xbf16>
    %c0_35 = arith.constant 0 : index
    %c0_36 = arith.constant 0 : index
    %71 = vector.load %arg6[%c0_35, %c0_36] : memref<24x72xbf16, #tpu.memory_space<vmem>>, vector<24x72xbf16>
    tpu.vector_store %arg6[%c0_35, %c0_36], %70 {strides = array<i32>} : memref<24x72xbf16, #tpu.memory_space<vmem>>, vector<24x72xbf16>,
    return
  }
  func.func @transform_0(%arg0: i32) -> (i32, i32) {
    %c0_i32 = arith.constant 0 : i32
    %c0_i32_0 = arith.constant 0 : i32
    return %arg0, %c0_i32 : i32, i32
  }
  func.func @transform_1(%arg0: i32) -> (i32, i32, i32) {
    %c0_i32 = arith.constant 0 : i32
    %c0_i32_0 = arith.constant 0 : i32
    %c0_i32_1 = arith.constant 0 : i32
    %c0_i32_2 = arith.constant 0 : i32
    return %c0_i32, %c0_i32_0, %c0_i32_1 : i32, i32, i32
  }
  func.func @transform_2(%arg0: i32) -> (i32, i32) {
    %c0_i32 = arith.constant 0 : i32
    %c0_i32_0 = arith.constant 0 : i32
    %c0_i32_1 = arith.constant 0 : i32
    return %c0_i32, %c0_i32_0 : i32, i32
  }
  func.func @transform_3(%arg0: i32) -> (i32, i32, i32) {
    %c0_i32 = arith.constant 0 : i32
    %c0_i32_0 = arith.constant 0 : i32
    %c0_i32_1 = arith.constant 0 : i32
    %c0_i32_2 = arith.constant 0 : i32
    return %c0_i32, %c0_i32_0, %c0_i32_1 : i32, i32, i32
  }
  func.func @transform_4(%arg0: i32) -> (i32, i32) {
    %c0_i32 = arith.constant 0 : i32
    %c0_i32_0 = arith.constant 0 : i32
    %c0_i32_1 = arith.constant 0 : i32
    return %c0_i32, %c0_i32_0 : i32, i32
  }
  func.func @transform_5(%arg0: i32) -> (i32, i32) {
    %c0_i32 = arith.constant 0 : i32
    %c0_i32_0 = arith.constant 0 : i32
    return %arg0, %c0_i32 : i32, i32
  }
}

</mosaic_0001>

<llo_original>
// kernel: resblock_pallas.1
$region0: #{resblock_pallas.1}
  #allocation0 [shape = 'u32[]', space=smem, size = 0x4, offset = 0x4, fixed_abs, tag = 'smem constant byte address 0x4 - core index']
  #allocation1 [shape = 'u32[144,128]{1,0:T(1,128)}', space=vmem, size = 0x12000, scoped, tag = 'internal scratch']
  %s0 = inlined_call_operand.vmem [shape: f32[48,72], index: 0, kind: input, shape index: {}]
  %s1 = inlined_call_operand.vmem [shape: bf16[3,72,72], index: 1, kind: input, shape index: {}]
  %s2 = inlined_call_operand.vmem [shape: f32[1,72], index: 2, kind: input, shape index: {}]
  %s3 = inlined_call_operand.vmem [shape: bf16[3,72,72], index: 3, kind: input, shape index: {}]
  %s4 = inlined_call_operand.vmem [shape: f32[1,72], index: 4, kind: input, shape index: {}]
  %s5 = inlined_call_operand.vmem [shape: bf16[48,72], index: 5, kind: output, shape index: {}]
  %s6 = sld [smem:[#allocation0]]
  $region53: #{resblock_pallas.1} parent=0
    _
  %s8 = ssub.s32 1, %s6
  %s9 = scalar_select 0, %s8, %s6
  loop: start=0, step=1, limit=4
  $region2: #{resblock_pallas.1} parent=0 // loop_pre_header
    _
  $region3: #{resblock_pallas.1} parent=0 // loop_header
    %s11 = sphi 0, %s15
    %p12 = scmp.ge.s32.totalorder %s11, 4
    %s21 = sphi 0, %s23
    %s24 = sphi 0, %s21
    %s25 = sphi 0, %s24
    %s41 = sphi 0, %s25
    %s45 = sphi 0, %s45
    %s47 = sphi 0, %s45
    %s48 = sphi 0, %s47
    %s62 = sphi 0, %s48
    %s66 = sphi 0, %s66
    %s68 = sphi 0, %s66
    %s69 = sphi 0, %s68
    %s83 = sphi 0, %s69
    %s87 = sphi 0, %s87
    %s89 = sphi 0, %s87
    %s90 = sphi 0, %s89
    %s104 = sphi 0, %s90
    %s108 = sphi 0, %s108
    %s110 = sphi 0, %s108
    %s111 = sphi 0, %s110
    %s125 = sphi 0, %s111
    %s131 = sphi 0, %s133
    %s134 = sphi 0, %s131
    %s135 = sphi 0, %s134
    %s151 = sphi 0, %s135
  $region4: #{resblock_pallas.1} parent=0 // loop_header_branch
    %14 = sbr.rel (%p12) target = $region8
  $region5: #{resblock_pallas.1} parent=0 // loop_body
    %s16 = ssub.s32 %s11, 1
    %s17 = ssub.s32 %s11, 2
    %s18 = sadd.s32 %s11, 1
    %s19 = ssub.s32 %s11, %s18
    %p20 = scmp.eq.s32.totalorder %s19, 0
    %s22 = sadd.s32 %s21, 1
    %s23 = scalar_select %p20, %s21, %s22
    %p26 = pneg %p20
    %p27 = scmp.eq.s32.totalorder %s11, 1
    %p28 = por %p26, %p27
    %p29 = scmp.ne.s32.totalorder %s21, %s24
    %p30 = scmp.eq.s32.totalorder %s11, 0
    %p31 = por %p29, %p30
    %p32 = scmp.ne.s32.totalorder %s21, %s24
    %p33 = scmp.eq.s32.totalorder %s16, 1
    %p34 = por %p32, %p33
    %p35 = scmp.ne.s32.totalorder %s24, %s25
    %p36 = scmp.eq.s32.totalorder %s16, 0
    %p37 = por %p35, %p36
    %p38 = scmp.ne.s32.totalorder %s24, %s25
    %p39 = scmp.eq.s32.totalorder %s17, 1
    %p40 = por %p38, %p39
    %p42 = scmp.ne.s32.totalorder %s25, %s41
    %p43 = scmp.eq.s32.totalorder %s17, 0
    %p44 = por %p42, %p43
    %s46 = sadd.s32 %s45, 1
    %p49 = scmp.eq.s32.totalorder %s11, 1
    %p50 = scmp.ne.s32.totalorder %s45, %s47
    %p51 = scmp.eq.s32.totalorder %s11, 0
    %p52 = por %p50, %p51
    %p53 = scmp.ne.s32.totalorder %s45, %s47
    %p54 = scmp.eq.s32.totalorder %s16, 1
    %p55 = por %p53, %p54
    %p56 = scmp.ne.s32.totalorder %s47, %s48
    %p57 = scmp.eq.s32.totalorder %s16, 0
    %p58 = por %p56, %p57
    %p59 = scmp.ne.s32.totalorder %s47, %s48
    %p60 = scmp.eq.s32.totalorder %s17, 1
    %p61 = por %p59, %p60
    %p63 = scmp.ne.s32.totalorder %s48, %s62
    %p64 = scmp.eq.s32.totalorder %s17, 0
    %p65 = por %p63, %p64
    %s67 = sadd.s32 %s66, 1
    %p70 = scmp.eq.s32.totalorder %s11, 1
    %p71 = scmp.ne.s32.totalorder %s66, %s68
    %p72 = scmp.eq.s32.totalorder %s11, 0
    %p73 = por %p71, %p72
    %p74 = scmp.ne.s32.totalorder %s66, %s68
    %p75 = scmp.eq.s32.totalorder %s16, 1
    %p76 = por %p74, %p75
    %p77 = scmp.ne.s32.totalorder %s68, %s69
    %p78 = scmp.eq.s32.totalorder %s16, 0
    %p79 = por %p77, %p78
    %p80 = scmp.ne.s32.totalorder %s68, %s69
    %p81 = scmp.eq.s32.totalorder %s17, 1
    %p82 = por %p80, %p81
    %p84 = scmp.ne.s32.totalorder %s69, %s83
    %p85 = scmp.eq.s32.totalorder %s17, 0
    %p86 = por %p84, %p85
    %s88 = sadd.s32 %s87, 1
    %p91 = scmp.eq.s32.totalorder %s11, 1
    %p92 = scmp.ne.s32.totalorder %s87, %s89
    %p93 = scmp.eq.s32.totalorder %s11, 0
    %p94 = por %p92, %p93
    %p95 = scmp.ne.s32.totalorder %s87, %s89
    %p96 = scmp.eq.s32.totalorder %s16, 1
    %p97 = por %p95, %p96
    %p98 = scmp.ne.s32.totalorder %s89, %s90
    %p99 = scmp.eq.s32.totalorder %s16, 0
    %p100 = por %p98, %p99
    %p101 = scmp.ne.s32.totalorder %s89, %s90
    %p102 = scmp.eq.s32.totalorder %s17, 1
    %p103 = por %p101, %p102
    %p105 = scmp.ne.s32.totalorder %s90, %s104
    %p106 = scmp.eq.s32.totalorder %s17, 0
    %p107 = por %p105, %p106
    %s109 = sadd.s32 %s108, 1
    %p112 = scmp.eq.s32.totalorder %s11, 1
    %p113 = scmp.ne.s32.totalorder %s108, %s110
    %p114 = scmp.eq.s32.totalorder %s11, 0
    %p115 = por %p113, %p114
    %p116 = scmp.ne.s32.totalorder %s108, %s110
    %p117 = scmp.eq.s32.totalorder %s16, 1
    %p118 = por %p116, %p117
    %p119 = scmp.ne.s32.totalorder %s110, %s111
    %p120 = scmp.eq.s32.totalorder %s16, 0
    %p121 = por %p119, %p120
    %p122 = scmp.ne.s32.totalorder %s110, %s111
    %p123 = scmp.eq.s32.totalorder %s17, 1
    %p124 = por %p122, %p123
    %p126 = scmp.ne.s32.totalorder %s111, %s125
    %p127 = scmp.eq.s32.totalorder %s17, 0
    %p128 = por %p126, %p127
    %s129 = ssub.s32 %s11, %s18
    %p130 = scmp.eq.s32.totalorder %s129, 0
    %s132 = sadd.s32 %s131, 1
    %s133 = scalar_select %p130, %s131, %s132
    %p136 = pneg %p130
    %p137 = scmp.eq.s32.totalorder %s11, 1
    %p138 = por %p136, %p137
    %p139 = scmp.ne.s32.totalorder %s131, %s134
    %p140 = scmp.eq.s32.totalorder %s11, 0
    %p141 = por %p139, %p140
    %p142 = scmp.ne.s32.totalorder %s131, %s134
    %p143 = scmp.eq.s32.totalorder %s16, 1
    %p144 = por %p142, %p143
    %p145 = scmp.ne.s32.totalorder %s134, %s135
    %p146 = scmp.eq.s32.totalorder %s16, 0
    %p147 = por %p145, %p146
    %p148 = scmp.ne.s32.totalorder %s134, %s135
    %p149 = scmp.eq.s32.totalorder %s17, 1
    %p150 = por %p148, %p149
    %p152 = scmp.ne.s32.totalorder %s135, %s151
    %p153 = scmp.eq.s32.totalorder %s17, 0
    %p154 = por %p152, %p153
    %p155 = scmp.le.s32.totalorder 1, %s11
    %p156 = scmp.lt.s32.totalorder %s11, 3
    %p157 = pnand %p155, %p156
    %p158 = pneg %p157
    // Predicated region
    $region9: #{resblock_pallas.1} parent=5 // pred_check
      _
    $region10: #{resblock_pallas.1} parent=5 // pred_check_branch
      %160 = sbr.rel (%p157) target = $region12
    $region11: #{resblock_pallas.1} parent=5 // pred_region
      %s161 = ssub.s32 %s11, 1
      // Predicated region
      $region13: #{resblock_pallas.1} parent=11 // pred_check
        %p162 = pneg %p58
      $region14: #{resblock_pallas.1} parent=11 // pred_check_branch
        %164 = sbr.rel (%p162) target = $region16
      $region15: #{resblock_pallas.1} parent=11 // pred_region
        _
      $region16: #{resblock_pallas.1} parent=11 // pred_fallthru
        _
      // Predicated region
      $region17: #{resblock_pallas.1} parent=11 // pred_check
        %p165 = pneg %p79
      $region18: #{resblock_pallas.1} parent=11 // pred_check_branch
        %167 = sbr.rel (%p165) target = $region20
      $region19: #{resblock_pallas.1} parent=11 // pred_region
        _
      $region20: #{resblock_pallas.1} parent=11 // pred_fallthru
        _
      // Predicated region
      $region21: #{resblock_pallas.1} parent=11 // pred_check
        %p168 = pneg %p100
      $region22: #{resblock_pallas.1} parent=11 // pred_check_branch
        %170 = sbr.rel (%p168) target = $region24
      $region23: #{resblock_pallas.1} parent=11 // pred_region
        _
      $region24: #{resblock_pallas.1} parent=11 // pred_fallthru
        _
      // Predicated region
      $region25: #{resblock_pallas.1} parent=11 // pred_check
        %p171 = pneg %p121
      $region26: #{resblock_pallas.1} parent=11 // pred_check_branch
        %173 = sbr.rel (%p171) target = $region28
      $region27: #{resblock_pallas.1} parent=11 // pred_region
        _
      $region28: #{resblock_pallas.1} parent=11 // pred_fallthru
        _
    $region12: #{resblock_pallas.1} parent=5 // pred_fallthru
      _
    %p174 = scmp.lt.s32.totalorder %s11, 2
    // Predicated region
    $region29: #{resblock_pallas.1} parent=5 // pred_check
      %p175 = pneg %p174
    $region30: #{resblock_pallas.1} parent=5 // pred_check_branch
      %177 = sbr.rel (%p175) target = $region32
    $region31: #{resblock_pallas.1} parent=5 // pred_region
      // Predicated region
      $region33: #{resblock_pallas.1} parent=31 // pred_check
        %p178 = pneg %p31
      $region34: #{resblock_pallas.1} parent=31 // pred_check_branch
        %180 = sbr.rel (%p178) target = $region36
      $region35: #{resblock_pallas.1} parent=31 // pred_region
        %s181 = smul.u32 3, %s11
        %p182 = scmp.lt.s32.totalorder %s181, 5
        %s183 = scalar_select %p182, %s181, 5
        %s184 = smul.addr %s183, 8
        %s185 = scalar_lea.vmem %s0, %s184
        %s186 = smul.u32 3, %s11
      $region36: #{resblock_pallas.1} parent=31 // pred_fallthru
        _
    $region32: #{resblock_pallas.1} parent=5 // pred_fallthru
      _
    %p187 = scmp.le.s32.totalorder 1, %s11
    %p188 = scmp.lt.s32.totalorder %s11, 3
    %p189 = pnand %p187, %p188
    %p190 = pneg %p189
    // Predicated region
    $region37: #{resblock_pallas.1} parent=5 // pred_check
      _
    $region38: #{resblock_pallas.1} parent=5 // pred_check_branch
      %192 = sbr.rel (%p189) target = $region40
    $region39: #{resblock_pallas.1} parent=5 // pred_region
      %s193 = ssub.s32 %s11, 1
      %s194 = smul.u32 3, %s16
      %p195 = scmp.lt.s32.totalorder %s194, 5
      %s196 = scalar_select %p195, %s194, 5
      %s197 = smul.addr %s196, 8
      %s198 = scalar_lea.vmem %s0, %s197
      %p199 = pneg %p37
      %p200 = pneg %p34
      %p201 = pneg %p58
      %p202 = pneg %p55
      %p203 = pneg %p79
      %p204 = pneg %p76
      %p205 = pneg %p100
      %p206 = pneg %p97
      %p207 = pneg %p121
      %p208 = pneg %p118
      %p209 = pneg %p147
      %p210 = pneg %p144
      %s211 = smul.u32 3, %s16
      %p212 = scmp.lt.s32.totalorder %s211, 5
      %s213 = scalar_select %p212, %s211, 5
      %s214 = smul.addr %s213, 4
      %s215 = scalar_lea.vmem %s5, %s214
      %s216 = smul.u32 3, %s16
      %p217 = scmp.lt.s32.totalorder %s216, 5
      %s218 = scalar_select %p217, %s216, 5
      %s219 = smul.addr %s218, 8
      %s220 = scalar_lea.vmem %s0, %s219
      %s221 = smul.u32 3, %s16
      %s222 = smul.u32 3, %s16
      %p223 = scmp.lt.s32.totalorder %s222, 5
      %s224 = scalar_select %p223, %s222, 5
      %s225 = smul.addr %s224, 4
      %s226 = scalar_lea.vmem %s5, %s225
      %s227 = smul.u32 3, %s16
      %v229 = vld [vmem:[%s220] sm:$0xff]
      %v230 = vld [vmem:[%s220 + $0x8] sm:$0xff]
      %v231 = vld [vmem:[%s220 + $0x10] sm:$0xff]
      %v232 = vlaneseq
      %v233 = vshrl.u32 %v232, 7
      %v234 = vadd.s32 %v233, 8
      %v235 = vadd.s32 %v233, 16
      %vm236 = vcmp.lt.s32.totalorder %v233, 0
      %v237 = vsub.s32 0, %v233
      %v238 = vsel %vm236, %v237, %v233
      %v239 = vmul.u32.u64.compose %v238, 2863311531
      %v240 = vextract.low.u32 %v239
      %v241 = vextract.high.u32 %v239
      %v242 = vshrl.u32 %v241, 4
      %v243 = vmul.u32 %v242, 24
      %v244 = vsub.s32 %v238, %v243
      %v245 = vsub.s32 0, %v244
      %v246 = vsel %vm236, %v245, %v244
      %vm247 = vcmp.lt.s32.totalorder %v234, 0
      %v248 = vsub.s32 0, %v234
      %v249 = vsel %vm247, %v248, %v234
      %v250 = vmul.u32.u64.compose %v249, 2863311531
      %v251 = vextract.low.u32 %v250
      %v252 = vextract.high.u32 %v250
      %v253 = vshrl.u32 %v252, 4
      %v254 = vmul.u32 %v253, 24
      %v255 = vsub.s32 %v249, %v254
      %v256 = vsub.s32 0, %v255
      %v257 = vsel %vm247, %v256, %v255
      %vm258 = vcmp.lt.s32.totalorder %v235, 0
      %v259 = vsub.s32 0, %v235
      %v260 = vsel %vm258, %v259, %v235
      %v261 = vmul.u32.u64.compose %v260, 2863311531
      %v262 = vextract.low.u32 %v261
      %v263 = vextract.high.u32 %v261
      %v264 = vshrl.u32 %v263, 4
      %v265 = vmul.u32 %v264, 24
      %v266 = vsub.s32 %v260, %v265
      %v267 = vsub.s32 0, %v266
      %v268 = vsel %vm258, %v267, %v266
      %vm269 = vcmp.ne.s32.totalorder %v246, 0
      %vm270 = vcmp.ne.s32.totalorder %v257, 0
      %vm271 = vcmp.ne.s32.totalorder %v268, 0
      %vm272 = vcmp.lt.s32.totalorder %v246, 0
      %vm273 = vcmp.lt.s32.totalorder %v257, 0
      %vm274 = vcmp.lt.s32.totalorder %v268, 0
      %vm275 = vmand %vm272, %vm269
      %vm276 = vmand %vm273, %vm270
      %vm277 = vmand %vm274, %vm271
      %v278 = vadd.s32 %v246, 24
      %v279 = vadd.s32 %v257, 24
      %v280 = vadd.s32 %v268, 24
      %v281 = vsel %vm275, %v278, %v246
      %v282 = vsel %vm276, %v279, %v257
      %v283 = vsel %vm277, %v280, %v268
      %vm284 = vcmp.ge.s32.totalorder %v281, 1
      %vm285 = vcmp.ge.s32.totalorder %v282, 1
      %vm286 = vcmp.ge.s32.totalorder %v283, 1
      %vm287 = vcmp.le.s32.totalorder %v281, 16
      %vm288 = vcmp.le.s32.totalorder %v282, 16
      %vm289 = vcmp.le.s32.totalorder %v283, 16
      %vm290 = vmand %vm284, %vm287
      %vm291 = vmand %vm285, %vm288
      %vm292 = vmand %vm286, %vm289
      %v293 = vsel %vm290, 1, 0
      %v294 = vsel %vm291, 1, 0
      %v295 = vsel %vm292, 1, 0
      %v296 = vcvt.s32.f32 %v293
      %v297 = vcvt.s32.f32 %v294
      %v298 = vcvt.s32.f32 %v295
      %v299 = vrot.slane %v229, 7
      %v300 = vrot.slane %v230, 7
      %v301 = vrot.slane %v231, 7
      %vm302 = vcmp.lt.s32.totalorder %v233, 1
      %v303 = vsel %vm302, %v300, %v301
      %v304 = vsel %vm302, %v299, %v300
      %v305 = vsel %vm302, %v301, %v299
      %v306 = vrot.slane %v229, 1
      %v307 = vrot.slane %v230, 1
      %v308 = vrot.slane %v231, 1
      %vm309 = vcmp.lt.s32.totalorder %v233, 7
      %v310 = vsel %vm309, %v307, %v308
      %v311 = vsel %vm309, %v306, %v307
      %v312 = vsel %vm309, %v308, %v306
      %v313 = vpack.c.bf16 %v304, %v305
      %v314 = vpack.c.bf16 %v303, %v303
      %v315 = vld [vmem:[%s1] sm:$0xf]
      %v316 = vld [vmem:[%s1 + $0x4] sm:$0xf]
      %v317 = vld [vmem:[%s1 + $0x8] sm:$0xf]
      %v318 = vld [vmem:[%s1 + $0xc] sm:$0xf]
      %v319 = vld [vmem:[%s1 + $0x10] sm:$0xf]
      %v320 = vld [vmem:[%s1 + $0x14] sm:$0xf]
      %v321 = vld [vmem:[%s1 + $0x18] sm:$0xf]
      %v322 = vld [vmem:[%s1 + $0x1c] sm:$0xf]
      %v323 = vld [vmem:[%s1 + $0x20] sm:$0xf]
      %v324 = vpack.c.bf16 %v230, %v229
      %v325 = vpack.c.bf16 %v231, %v231
      %s326 = scalar_lea.vmem %s1, 36
      %v327 = vld [vmem:[%s326] sm:$0xf]
      %v328 = vld [vmem:[%s326 + $0x4] sm:$0xf]
      %v329 = vld [vmem:[%s326 + $0x8] sm:$0xf]
      %v330 = vld [vmem:[%s326 + $0xc] sm:$0xf]
      %v331 = vld [vmem:[%s326 + $0x10] sm:$0xf]
      %v332 = vld [vmem:[%s326 + $0x14] sm:$0xf]
      %v333 = vld [vmem:[%s326 + $0x18] sm:$0xf]
      %v334 = vld [vmem:[%s326 + $0x1c] sm:$0xf]
      %v335 = vld [vmem:[%s326 + $0x20] sm:$0xf]
      %v345 = vunpack.c.l.b16 %v327
      %v346 = vunpack.c.l.b16 %v328
      %v347 = vunpack.c.l.b16 %v329
      %v348 = vunpack.c.l.b16 %v330
      %v349 = vunpack.c.l.b16 %v331
      %v350 = vunpack.c.l.b16 %v332
      %v351 = vunpack.c.l.b16 %v333
      %v352 = vunpack.c.l.b16 %v334
      %v353 = vunpack.c.l.b16 %v335
      %v354 = vpack.c.b16 %v346, %v345
      %v355 = vpack.c.b16 %v348, %v347
      %v356 = vpack.c.b16 %v350, %v349
      %v357 = vpack.c.b16 %v352, %v351
      %v358 = vpack.c.b16 %v353, %v353
      %vm363 = vcmask 588800
      %v365 = vsel %vm363, %v324, 0
      %v368 = vsel %vm363, %v325, 0
      %vm370 = vcmask 1043456
      %v372 = vsel %vm370, %v358, 0
      %374 = vmatprep.subr.bf16.mxu0 0
      %375 = vmatpush1.bf16.msra.mxu0 0
      %376 = vmatprep.subr.bf16.mxu0 0
      %377 = vmatpush1.bf16.msra.mxu0 0
      %378 = vmatprep.subr.bf16.mxu0 0
      %379 = vmatpush1.bf16.msra.mxu0 0
      %380 = vmatprep.subr.bf16.mxu0 0
      %381 = vmatpush1.bf16.msra.mxu0 %v372
      %382 = vmatprep.subr.bf16.mxu0 0
      %383 = vmatpush1.bf16.msra.mxu0 %v357
      %384 = vmatprep.subr.bf16.mxu0 0
      %385 = vmatpush1.bf16.msra.mxu0 %v356
      %386 = vmatprep.subr.bf16.mxu0 0
      %387 = vmatpush1.bf16.msra.mxu0 %v355
      %388 = vmatprep.subr.bf16.mxu0 0
      %389 = vmatpush1.bf16.msra.mxu0 %v354
      %390 = vmatprep.subr.bf16.mxu0 0
      %391 = vmatpush2.bf16.msra.mxu0 0
      %392 = vmatprep.subr.bf16.mxu0 0
      %393 = vmatpush2.bf16.msra.mxu0 0
      %394 = vmatprep.subr.bf16.mxu0 0
      %395 = vmatpush2.bf16.msra.mxu0 0
      %396 = vmatprep.subr.bf16.mxu0 0
      %397 = vmatpush2.bf16.msra.mxu0 0
      %398 = vmatprep.subr.bf16.mxu0 0
      %399 = vmatpush2.bf16.msra.mxu0 0
      %400 = vmatprep.subr.bf16.mxu0 0
      %401 = vmatpush2.bf16.msra.mxu0 0
      %402 = vmatprep.subr.bf16.mxu0 0
      %403 = vmatpush2.bf16.msra.mxu0 0
      %404 = vmatprep.subr.bf16.mxu0 0
      %405 = vmatpush2.bf16.msra.mxu0 0
      %406 = vmatprep.mubr.bf16.mxu0 0
      %407 = vmatmul.mubr.bf16.gmra.mxu0 %v365
      %v408 = vpop.f32.mrf.mxu0
      %v409 = vadd.f32 0.0, %v408
      %v410 = vpop.f32.mrf.mxu0
      %v411 = vpop.f32.mrf.mxu0
      %v412 = vadd.f32 0.0, %v411
      %v413 = vpop.f32.mrf.mxu0
      %414 = vmatprep.mubr.bf16.mxu0 0
      %415 = vmatmul.mubr.bf16.gmra.mxu0 %v368
      %v416 = vpop.f32.mrf.mxu0
      %v417 = vadd.f32 0.0, %v416
      %v418 = vpop.f32.mrf.mxu0
      %v419 = vpop.f32.mrf.mxu0
      %v420 = vpop.f32.mrf.mxu0
      %421 = vdwg.mxu0
      %v431 = vunpack.c.l.b16 %v315
      %v432 = vunpack.c.l.b16 %v316
      %v433 = vunpack.c.l.b16 %v317
      %v434 = vunpack.c.l.b16 %v318
      %v435 = vunpack.c.l.b16 %v319
      %v436 = vunpack.c.l.b16 %v320
      %v437 = vunpack.c.l.b16 %v321
      %v438 = vunpack.c.l.b16 %v322
      %v439 = vunpack.c.l.b16 %v323
      %v440 = vpack.c.b16 %v432, %v431
      %v441 = vpack.c.b16 %v434, %v433
      %v442 = vpack.c.b16 %v436, %v435
      %v443 = vpack.c.b16 %v438, %v437
      %v444 = vpack.c.b16 %v439, %v439
      %v450 = vsel %vm363, %v313, 0
      %v453 = vsel %vm363, %v314, 0
      %v456 = vsel %vm370, %v444, 0
      %458 = vmatprep.subr.bf16.mxu0 0
      %459 = vmatpush1.bf16.msra.mxu0 0
      %460 = vmatprep.subr.bf16.mxu0 0
      %461 = vmatpush1.bf16.msra.mxu0 0
      %462 = vmatprep.subr.bf16.mxu0 0
      %463 = vmatpush1.bf16.msra.mxu0 0
      %464 = vmatprep.subr.bf16.mxu0 0
      %465 = vmatpush1.bf16.msra.mxu0 %v456
      %466 = vmatprep.subr.bf16.mxu0 0
      %467 = vmatpush1.bf16.msra.mxu0 %v443
      %468 = vmatprep.subr.bf16.mxu0 0
      %469 = vmatpush1.bf16.msra.mxu0 %v442
      %470 = vmatprep.subr.bf16.mxu0 0
      %471 = vmatpush1.bf16.msra.mxu0 %v441
      %472 = vmatprep.subr.bf16.mxu0 0
      %473 = vmatpush1.bf16.msra.mxu0 %v440
      %474 = vmatprep.subr.bf16.mxu0 0
      %475 = vmatpush2.bf16.msra.mxu0 0
      %476 = vmatprep.subr.bf16.mxu0 0
      %477 = vmatpush2.bf16.msra.mxu0 0
      %478 = vmatprep.subr.bf16.mxu0 0
      %479 = vmatpush2.bf16.msra.mxu0 0
      %480 = vmatprep.subr.bf16.mxu0 0
      %481 = vmatpush2.bf16.msra.mxu0 0
      %482 = vmatprep.subr.bf16.mxu0 0
      %483 = vmatpush2.bf16.msra.mxu0 0
      %484 = vmatprep.subr.bf16.mxu0 0
      %485 = vmatpush2.bf16.msra.mxu0 0
      %486 = vmatprep.subr.bf16.mxu0 0
      %487 = vmatpush2.bf16.msra.mxu0 0
      %488 = vmatprep.subr.bf16.mxu0 0
      %489 = vmatpush2.bf16.msra.mxu0 0
      %490 = vmatprep.mubr.bf16.mxu0 0
      %491 = vmatmul.mubr.bf16.gmra.mxu0 %v450
      %v492 = vpop.f32.mrf.mxu0
      %v493 = vadd.f32 %v409, %v492
      %v494 = vpop.f32.mrf.mxu0
      %v495 = vpop.f32.mrf.mxu0
      %v496 = vadd.f32 %v412, %v495
      %v497 = vpop.f32.mrf.mxu0
      %498 = vmatprep.mubr.bf16.mxu0 0
      %499 = vmatmul.mubr.bf16.gmra.mxu0 %v453
      %v500 = vpop.f32.mrf.mxu0
      %v501 = vadd.f32 %v417, %v500
      %v502 = vpop.f32.mrf.mxu0
      %v503 = vpop.f32.mrf.mxu0
      %v504 = vpop.f32.mrf.mxu0
      %505 = vdwg.mxu0
      %v506 = vpack.c.bf16 %v310, %v311
      %v507 = vpack.c.bf16 %v312, %v312
      %s508 = scalar_lea.vmem %s1, 72
      %v509 = vld [vmem:[%s508] sm:$0xf]
      %v510 = vld [vmem:[%s508 + $0x4] sm:$0xf]
      %v511 = vld [vmem:[%s508 + $0x8] sm:$0xf]
      %v512 = vld [vmem:[%s508 + $0xc] sm:$0xf]
      %v513 = vld [vmem:[%s508 + $0x10] sm:$0xf]
      %v514 = vld [vmem:[%s508 + $0x14] sm:$0xf]
      %v515 = vld [vmem:[%s508 + $0x18] sm:$0xf]
      %v516 = vld [vmem:[%s508 + $0x1c] sm:$0xf]
      %v517 = vld [vmem:[%s508 + $0x20] sm:$0xf]
      %v527 = vunpack.c.l.b16 %v509
      %v528 = vunpack.c.l.b16 %v510
      %v529 = vunpack.c.l.b16 %v511
      %v530 = vunpack.c.l.b16 %v512
      %v531 = vunpack.c.l.b16 %v513
      %v532 = vunpack.c.l.b16 %v514
      %v533 = vunpack.c.l.b16 %v515
      %v534 = vunpack.c.l.b16 %v516
      %v535 = vunpack.c.l.b16 %v517
      %v536 = vpack.c.b16 %v528, %v527
      %v537 = vpack.c.b16 %v530, %v529
      %v538 = vpack.c.b16 %v532, %v531
      %v539 = vpack.c.b16 %v534, %v533
      %v540 = vpack.c.b16 %v535, %v535
      %v546 = vsel %vm363, %v506, 0
      %v549 = vsel %vm363, %v507, 0
      %v552 = vsel %vm370, %v540, 0
      %554 = vmatprep.subr.bf16.mxu0 0
      %555 = vmatpush1.bf16.msra.mxu0 0
      %556 = vmatprep.subr.bf16.mxu0 0
      %557 = vmatpush1.bf16.msra.mxu0 0
      %558 = vmatprep.subr.bf16.mxu0 0
      %559 = vmatpush1.bf16.msra.mxu0 0
      %560 = vmatprep.subr.bf16.mxu0 0
      %561 = vmatpush1.bf16.msra.mxu0 %v552
      %562 = vmatprep.subr.bf16.mxu0 0
      %563 = vmatpush1.bf16.msra.mxu0 %v539
      %564 = vmatprep.subr.bf16.mxu0 0
      %565 = vmatpush1.bf16.msra.mxu0 %v538
      %566 = vmatprep.subr.bf16.mxu0 0
      %567 = vmatpush1.bf16.msra.mxu0 %v537
      %568 = vmatprep.subr.bf16.mxu0 0
      %569 = vmatpush1.bf16.msra.mxu0 %v536
      %570 = vmatprep.subr.bf16.mxu0 0
      %571 = vmatpush2.bf16.msra.mxu0 0
      %572 = vmatprep.subr.bf16.mxu0 0
      %573 = vmatpush2.bf16.msra.mxu0 0
      %574 = vmatprep.subr.bf16.mxu0 0
      %575 = vmatpush2.bf16.msra.mxu0 0
      %576 = vmatprep.subr.bf16.mxu0 0
      %577 = vmatpush2.bf16.msra.mxu0 0
      %578 = vmatprep.subr.bf16.mxu0 0
      %579 = vmatpush2.bf16.msra.mxu0 0
      %580 = vmatprep.subr.bf16.mxu0 0
      %581 = vmatpush2.bf16.msra.mxu0 0
      %582 = vmatprep.subr.bf16.mxu0 0
      %583 = vmatpush2.bf16.msra.mxu0 0
      %584 = vmatprep.subr.bf16.mxu0 0
      %585 = vmatpush2.bf16.msra.mxu0 0
      %586 = vmatprep.mubr.bf16.mxu0 0
      %587 = vmatmul.mubr.bf16.gmra.mxu0 %v546
      %v588 = vpop.f32.mrf.mxu0
      %v589 = vadd.f32 0.0, %v588
      %v590 = vpop.f32.mrf.mxu0
      %v591 = vpop.f32.mrf.mxu0
      %v592 = vadd.f32 0.0, %v591
      %v593 = vpop.f32.mrf.mxu0
      %594 = vmatprep.mubr.bf16.mxu0 0
      %595 = vmatmul.mubr.bf16.gmra.mxu0 %v549
      %v596 = vpop.f32.mrf.mxu0
      %v597 = vadd.f32 0.0, %v596
      %v598 = vpop.f32.mrf.mxu0
      %v599 = vpop.f32.mrf.mxu0
      %v600 = vpop.f32.mrf.mxu0
      %601 = vdwg.mxu0
      %v602 = vadd.f32 %v493, %v589
      %v603 = vadd.f32 %v496, %v592
      %v604 = vadd.f32 %v501, %v597
      %v605 = vld [vmem:[%s2] sm:$0x1]
      %v607 = vlaneseq
      %v608 = vshrl.u32 %v607, 7
      %v609 = vsub.s32 0, %v608
      %v610 = vrot.slane %v605, %v609
      %v612 = vadd.f32 %v602, %v610
      %v613 = vadd.f32 %v603, %v610
      %v614 = vadd.f32 %v604, %v610
      %v615 = vmax.f32 %v612, 0.0
      %v616 = vmax.f32 %v613, 0.0
      %v617 = vmax.f32 %v614, 0.0
      %v618 = vmul.f32 %v615, %v296
      %v619 = vmul.f32 %v616, %v297
      %v620 = vmul.f32 %v617, %v298
      %v621 = vrot.slane %v618, 7
      %v622 = vrot.slane %v619, 7
      %v623 = vrot.slane %v620, 7
      %v624 = vsel %vm302, %v622, %v623
      %v625 = vsel %vm302, %v621, %v622
      %v626 = vsel %vm302, %v623, %v621
      %v627 = vrot.slane %v618, 1
      %v628 = vrot.slane %v619, 1
      %v629 = vrot.slane %v620, 1
      %v630 = vsel %vm309, %v628, %v629
      %v631 = vsel %vm309, %v627, %v628
      %v632 = vsel %vm309, %v629, %v627
      %v633 = vpack.c.bf16 %v625, %v626
      %v634 = vpack.c.bf16 %v624, %v624
      %v635 = vld [vmem:[%s3] sm:$0xf]
      %v636 = vld [vmem:[%s3 + $0x4] sm:$0xf]
      %v637 = vld [vmem:[%s3 + $0x8] sm:$0xf]
      %v638 = vld [vmem:[%s3 + $0xc] sm:$0xf]
      %v639 = vld [vmem:[%s3 + $0x10] sm:$0xf]
      %v640 = vld [vmem:[%s3 + $0x14] sm:$0xf]
      %v641 = vld [vmem:[%s3 + $0x18] sm:$0xf]
      %v642 = vld [vmem:[%s3 + $0x1c] sm:$0xf]
      %v643 = vld [vmem:[%s3 + $0x20] sm:$0xf]
      %v644 = vpack.c.bf16 %v619, %v618
      %v645 = vpack.c.bf16 %v620, %v620
      %s646 = scalar_lea.vmem %s3, 36
      %v647 = vld [vmem:[%s646] sm:$0xf]
      %v648 = vld [vmem:[%s646 + $0x4] sm:$0xf]
      %v649 = vld [vmem:[%s646 + $0x8] sm:$0xf]
      %v650 = vld [vmem:[%s646 + $0xc] sm:$0xf]
      %v651 = vld [vmem:[%s646 + $0x10] sm:$0xf]
      %v652 = vld [vmem:[%s646 + $0x14] sm:$0xf]
      %v653 = vld [vmem:[%s646 + $0x18] sm:$0xf]
      %v654 = vld [vmem:[%s646 + $0x1c] sm:$0xf]
      %v655 = vld [vmem:[%s646 + $0x20] sm:$0xf]
      %v665 = vunpack.c.l.b16 %v647
      %v666 = vunpack.c.l.b16 %v648
      %v667 = vunpack.c.l.b16 %v649
      %v668 = vunpack.c.l.b16 %v650
      %v669 = vunpack.c.l.b16 %v651
      %v670 = vunpack.c.l.b16 %v652
      %v671 = vunpack.c.l.b16 %v653
      %v672 = vunpack.c.l.b16 %v654
      %v673 = vunpack.c.l.b16 %v655
      %v674 = vpack.c.b16 %v666, %v665
      %v675 = vpack.c.b16 %v668, %v667
      %v676 = vpack.c.b16 %v670, %v669
      %v677 = vpack.c.b16 %v672, %v671
      %v678 = vpack.c.b16 %v673, %v673
      %v684 = vsel %vm363, %v644, 0
      %v687 = vsel %vm363, %v645, 0
      %v690 = vsel %vm370, %v678, 0
      %692 = vmatprep.subr.bf16.mxu0 0
      %693 = vmatpush1.bf16.msra.mxu0 0
      %694 = vmatprep.subr.bf16.mxu0 0
      %695 = vmatpush1.bf16.msra.mxu0 0
      %696 = vmatprep.subr.bf16.mxu0 0
      %697 = vmatpush1.bf16.msra.mxu0 0
      %698 = vmatprep.subr.bf16.mxu0 0
      %699 = vmatpush1.bf16.msra.mxu0 %v690
      %700 = vmatprep.subr.bf16.mxu0 0
      %701 = vmatpush1.bf16.msra.mxu0 %v677
      %702 = vmatprep.subr.bf16.mxu0 0
      %703 = vmatpush1.bf16.msra.mxu0 %v676
      %704 = vmatprep.subr.bf16.mxu0 0
      %705 = vmatpush1.bf16.msra.mxu0 %v675
      %706 = vmatprep.subr.bf16.mxu0 0
      %707 = vmatpush1.bf16.msra.mxu0 %v674
      %708 = vmatprep.subr.bf16.mxu0 0
      %709 = vmatpush2.bf16.msra.mxu0 0
      %710 = vmatprep.subr.bf16.mxu0 0
      %711 = vmatpush2.bf16.msra.mxu0 0
      %712 = vmatprep.subr.bf16.mxu0 0
      %713 = vmatpush2.bf16.msra.mxu0 0
      %714 = vmatprep.subr.bf16.mxu0 0
      %715 = vmatpush2.bf16.msra.mxu0 0
      %716 = vmatprep.subr.bf16.mxu0 0
      %717 = vmatpush2.bf16.msra.mxu0 0
      %718 = vmatprep.subr.bf16.mxu0 0
      %719 = vmatpush2.bf16.msra.mxu0 0
      %720 = vmatprep.subr.bf16.mxu0 0
      %721 = vmatpush2.bf16.msra.mxu0 0
      %722 = vmatprep.subr.bf16.mxu0 0
      %723 = vmatpush2.bf16.msra.mxu0 0
      %724 = vmatprep.mubr.bf16.mxu0 0
      %725 = vmatmul.mubr.bf16.gmra.mxu0 %v684
      %v726 = vpop.f32.mrf.mxu0
      %v727 = vadd.f32 0.0, %v726
      %v728 = vpop.f32.mrf.mxu0
      %v729 = vpop.f32.mrf.mxu0
      %v730 = vadd.f32 0.0, %v729
      %v731 = vpop.f32.mrf.mxu0
      %732 = vmatprep.mubr.bf16.mxu0 0
      %733 = vmatmul.mubr.bf16.gmra.mxu0 %v687
      %v734 = vpop.f32.mrf.mxu0
      %v735 = vadd.f32 0.0, %v734
      %v736 = vpop.f32.mrf.mxu0
      %v737 = vpop.f32.mrf.mxu0
      %v738 = vpop.f32.mrf.mxu0
      %739 = vdwg.mxu0
      %v749 = vunpack.c.l.b16 %v635
      %v750 = vunpack.c.l.b16 %v636
      %v751 = vunpack.c.l.b16 %v637
      %v752 = vunpack.c.l.b16 %v638
      %v753 = vunpack.c.l.b16 %v639
      %v754 = vunpack.c.l.b16 %v640
      %v755 = vunpack.c.l.b16 %v641
      %v756 = vunpack.c.l.b16 %v642
      %v757 = vunpack.c.l.b16 %v643
      %v758 = vpack.c.b16 %v750, %v749
      %v759 = vpack.c.b16 %v752, %v751
      %v760 = vpack.c.b16 %v754, %v753
      %v761 = vpack.c.b16 %v756, %v755
      %v762 = vpack.c.b16 %v757, %v757
      %v768 = vsel %vm363, %v633, 0
      %v771 = vsel %vm363, %v634, 0
      %v774 = vsel %vm370, %v762, 0
      %776 = vmatprep.subr.bf16.mxu0 0
      %777 = vmatpush1.bf16.msra.mxu0 0
      %778 = vmatprep.subr.bf16.mxu0 0
      %779 = vmatpush1.bf16.msra.mxu0 0
      %780 = vmatprep.subr.bf16.mxu0 0
      %781 = vmatpush1.bf16.msra.mxu0 0
      %782 = vmatprep.subr.bf16.mxu0 0
      %783 = vmatpush1.bf16.msra.mxu0 %v774
      %784 = vmatprep.subr.bf16.mxu0 0
      %785 = vmatpush1.bf16.msra.mxu0 %v761
      %786 = vmatprep.subr.bf16.mxu0 0
      %787 = vmatpush1.bf16.msra.mxu0 %v760
      %788 = vmatprep.subr.bf16.mxu0 0
      %789 = vmatpush1.bf16.msra.mxu0 %v759
      %790 = vmatprep.subr.bf16.mxu0 0
      %791 = vmatpush1.bf16.msra.mxu0 %v758
      %792 = vmatprep.subr.bf16.mxu0 0
      %793 = vmatpush2.bf16.msra.mxu0 0
      %794 = vmatprep.subr.bf16.mxu0 0
      %795 = vmatpush2.bf16.msra.mxu0 0
      %796 = vmatprep.subr.bf16.mxu0 0
      %797 = vmatpush2.bf16.msra.mxu0 0
      %798 = vmatprep.subr.bf16.mxu0 0
      %799 = vmatpush2.bf16.msra.mxu0 0
      %800 = vmatprep.subr.bf16.mxu0 0
      %801 = vmatpush2.bf16.msra.mxu0 0
      %802 = vmatprep.subr.bf16.mxu0 0
      %803 = vmatpush2.bf16.msra.mxu0 0
      %804 = vmatprep.subr.bf16.mxu0 0
      %805 = vmatpush2.bf16.msra.mxu0 0
      %806 = vmatprep.subr.bf16.mxu0 0
      %807 = vmatpush2.bf16.msra.mxu0 0
      %808 = vmatprep.mubr.bf16.mxu0 0
      %809 = vmatmul.mubr.bf16.gmra.mxu0 %v768
      %v810 = vpop.f32.mrf.mxu0
      %v811 = vadd.f32 %v727, %v810
      %v812 = vpop.f32.mrf.mxu0
      %v813 = vpop.f32.mrf.mxu0
      %v814 = vadd.f32 %v730, %v813
      %v815 = vpop.f32.mrf.mxu0
      %816 = vmatprep.mubr.bf16.mxu0 0
      %817 = vmatmul.mubr.bf16.gmra.mxu0 %v771
      %v818 = vpop.f32.mrf.mxu0
      %v819 = vadd.f32 %v735, %v818
      %v820 = vpop.f32.mrf.mxu0
      %v821 = vpop.f32.mrf.mxu0
      %v822 = vpop.f32.mrf.mxu0
      %823 = vdwg.mxu0
      %v824 = vpack.c.bf16 %v630, %v631
      %v825 = vpack.c.bf16 %v632, %v632
      %s826 = scalar_lea.vmem %s3, 72
      %v827 = vld [vmem:[%s826] sm:$0xf]
      %v828 = vld [vmem:[%s826 + $0x4] sm:$0xf]
      %v829 = vld [vmem:[%s826 + $0x8] sm:$0xf]
      %v830 = vld [vmem:[%s826 + $0xc] sm:$0xf]
      %v831 = vld [vmem:[%s826 + $0x10] sm:$0xf]
      %v832 = vld [vmem:[%s826 + $0x14] sm:$0xf]
      %v833 = vld [vmem:[%s826 + $0x18] sm:$0xf]
      %v834 = vld [vmem:[%s826 + $0x1c] sm:$0xf]
      %v835 = vld [vmem:[%s826 + $0x20] sm:$0xf]
      %v845 = vunpack.c.l.b16 %v827
      %v846 = vunpack.c.l.b16 %v828
      %v847 = vunpack.c.l.b16 %v829
      %v848 = vunpack.c.l.b16 %v830
      %v849 = vunpack.c.l.b16 %v831
      %v850 = vunpack.c.l.b16 %v832
      %v851 = vunpack.c.l.b16 %v833
      %v852 = vunpack.c.l.b16 %v834
      %v853 = vunpack.c.l.b16 %v835
      %v854 = vpack.c.b16 %v846, %v845
      %v855 = vpack.c.b16 %v848, %v847
      %v856 = vpack.c.b16 %v850, %v849
      %v857 = vpack.c.b16 %v852, %v851
      %v858 = vpack.c.b16 %v853, %v853
      %v864 = vsel %vm363, %v824, 0
      %v867 = vsel %vm363, %v825, 0
      %v870 = vsel %vm370, %v858, 0
      %872 = vmatprep.subr.bf16.mxu0 0
      %873 = vmatpush1.bf16.msra.mxu0 0
      %874 = vmatprep.subr.bf16.mxu0 0
      %875 = vmatpush1.bf16.msra.mxu0 0
      %876 = vmatprep.subr.bf16.mxu0 0
      %877 = vmatpush1.bf16.msra.mxu0 0
      %878 = vmatprep.subr.bf16.mxu0 0
      %879 = vmatpush1.bf16.msra.mxu0 %v870
      %880 = vmatprep.subr.bf16.mxu0 0
      %881 = vmatpush1.bf16.msra.mxu0 %v857
      %882 = vmatprep.subr.bf16.mxu0 0
      %883 = vmatpush1.bf16.msra.mxu0 %v856
      %884 = vmatprep.subr.bf16.mxu0 0
      %885 = vmatpush1.bf16.msra.mxu0 %v855
      %886 = vmatprep.subr.bf16.mxu0 0
      %887 = vmatpush1.bf16.msra.mxu0 %v854
      %888 = vmatprep.subr.bf16.mxu0 0
      %889 = vmatpush2.bf16.msra.mxu0 0
      %890 = vmatprep.subr.bf16.mxu0 0
      %891 = vmatpush2.bf16.msra.mxu0 0
      %892 = vmatprep.subr.bf16.mxu0 0
      %893 = vmatpush2.bf16.msra.mxu0 0
      %894 = vmatprep.subr.bf16.mxu0 0
      %895 = vmatpush2.bf16.msra.mxu0 0
      %896 = vmatprep.subr.bf16.mxu0 0
      %897 = vmatpush2.bf16.msra.mxu0 0
      %898 = vmatprep.subr.bf16.mxu0 0
      %899 = vmatpush2.bf16.msra.mxu0 0
      %900 = vmatprep.subr.bf16.mxu0 0
      %901 = vmatpush2.bf16.msra.mxu0 0
      %902 = vmatprep.subr.bf16.mxu0 0
      %903 = vmatpush2.bf16.msra.mxu0 0
      %904 = vmatprep.mubr.bf16.mxu0 0
      %905 = vmatmul.mubr.bf16.gmra.mxu0 %v864
      %v906 = vpop.f32.mrf.mxu0
      %v907 = vadd.f32 0.0, %v906
      %v908 = vpop.f32.mrf.mxu0
      %v909 = vpop.f32.mrf.mxu0
      %v910 = vadd.f32 0.0, %v909
      %v911 = vpop.f32.mrf.mxu0
      %912 = vmatprep.mubr.bf16.mxu0 0
      %913 = vmatmul.mubr.bf16.gmra.mxu0 %v867
      %v914 = vpop.f32.mrf.mxu0
      %v915 = vadd.f32 0.0, %v914
      %v916 = vpop.f32.mrf.mxu0
      %v917 = vpop.f32.mrf.mxu0
      %v918 = vpop.f32.mrf.mxu0
      %919 = vdwg.mxu0
      %v920 = vadd.f32 %v811, %v907
      %v921 = vadd.f32 %v814, %v910
      %v922 = vadd.f32 %v819, %v915
      %v923 = vld [vmem:[%s4] sm:$0x1]
      %v925 = vlaneseq
      %v926 = vshrl.u32 %v925, 7
      %v927 = vsub.s32 0, %v926
      %v928 = vrot.slane %v923, %v927
      %v930 = vadd.f32 %v920, %v928
      %v931 = vadd.f32 %v921, %v928
      %v932 = vadd.f32 %v922, %v928
      %v933 = vadd.f32 %v930, %v229
      %v934 = vadd.f32 %v931, %v230
      %v935 = vadd.f32 %v932, %v231
      %v936 = vmax.f32 %v933, 0.0
      %v937 = vmax.f32 %v934, 0.0
      %v938 = vmax.f32 %v935, 0.0
      %v939 = vpack.c.bf16 %v937, %v936
      %v940 = vpack.c.bf16 %v938, %v938
      %v943 = vunpack.c.l.b16 %v939
      %v944 = vunpack.c.h.b16 %v939
      %v945 = vunpack.c.l.b16 %v940
      %v946 = vpack.c.b16 %v943, %v943
      %v947 = vpack.c.b16 %v944, %v944
      %v948 = vpack.c.b16 %v945, %v945
      %vm952 = vcmask 584704
      %953 = vst.msk [vmem:[%s226] sm:$0xf] %vm952, %v946
      %954 = vst.msk [vmem:[%s226 + $0x4] sm:$0xf] %vm952, %v947
      %955 = vst.msk [vmem:[%s226 + $0x8] sm:$0xf] %vm952, %v948
      %s956 = smul.u32 3, %s16
      %p957 = scmp.lt.s32.totalorder %s956, 5
      %s958 = scalar_select %p957, %s956, 5
      %s959 = smul.addr %s958, 4
      %s960 = scalar_lea.vmem %s5, %s959
      // Predicated region
      $region41: #{resblock_pallas.1} parent=39 // pred_check
        %p961 = pneg %p144
      $region42: #{resblock_pallas.1} parent=39 // pred_check_branch
        %963 = sbr.rel (%p961) target = $region44
      $region43: #{resblock_pallas.1} parent=39 // pred_region
        %s964 = smul.u32 3, %s16
      $region44: #{resblock_pallas.1} parent=39 // pred_fallthru
        _
    $region40: #{resblock_pallas.1} parent=5 // pred_fallthru
      _
    %p965 = scmp.le.s32.totalorder 2, %s11
    // Predicated region
    $region45: #{resblock_pallas.1} parent=5 // pred_check
      %p966 = pneg %p965
    $region46: #{resblock_pallas.1} parent=5 // pred_check_branch
      %968 = sbr.rel (%p966) target = $region48
    $region47: #{resblock_pallas.1} parent=5 // pred_region
      %s969 = ssub.s32 %s11, 2
      // Predicated region
      $region49: #{resblock_pallas.1} parent=47 // pred_check
        %p970 = pneg %p150
      $region50: #{resblock_pallas.1} parent=47 // pred_check_branch
        %972 = sbr.rel (%p970) target = $region52
      $region51: #{resblock_pallas.1} parent=47 // pred_region
        %s973 = smul.u32 3, %s17
        %p974 = scmp.lt.s32.totalorder %s973, 5
        %s975 = scalar_select %p974, %s973, 5
        %s976 = smul.addr %s975, 4
        %s977 = scalar_lea.vmem %s5, %s976
      $region52: #{resblock_pallas.1} parent=47 // pred_fallthru
        _
    $region48: #{resblock_pallas.1} parent=5 // pred_fallthru
      _
  $region6: #{resblock_pallas.1} parent=0 // loop_footer
    %s15 = sadd.s32 1, %s11
  $region7: #{resblock_pallas.1} parent=0 // loop_footer_branch
    %10 = sbr.rel target = $region3
  $region8: #{resblock_pallas.1} parent=0 // loop_exit
    _

</llo_original>
